<compile_context>
chip_gen: v6e
topology: v6e:2x2x1
jax: 0.10.0
libtpu: 0.0.40
codegen_flags: <defaults>
</compile_context>

<pallas_src>
import jax
import jax.numpy as jnp
from jax import lax
from jax.experimental import pallas as pl
from jax.experimental.pallas import tpu as pltpu

LANES = 128


def _round_up(x, m):
    return (x + m - 1) // m * m


def _mlp_kernel(x_ref, w1_ref, b1_ref, w2_ref, b2_ref, o_ref):
    # x_ref:  (TM, In) f32     w1_ref: (In, H) bf16 (pre-transposed once)
    # b1_ref: (1, H)   f32     w2_ref: (C, H)  bf16 (native PyTorch layout)
    # b2_ref: (C, 1)   f32     o_ref:  (C, TM) f32  (transposed, unpadded output)
    x = x_ref[...].astype(jnp.bfloat16)                      # cast hidden under MXU/DMA

    # h = x @ W1^T  -> canonical MXU feed: contract LHS lane with RHS sublane.
    h = lax.dot_general(x, w1_ref[...], (((1,), (0,)), ((), ())),
                        preferred_element_type=jnp.float32)   # (TM, H) f32
    h = jnp.maximum(h + b1_ref[...], 0.0).astype(jnp.bfloat16)

    # out_T = W2 @ h^T -> (C, TM): batch on the lane axis, class dim unpadded.
    out_t = lax.dot_general(w2_ref[...], h, (((1,), (1,)), ((), ())),
                            preferred_element_type=jnp.float32)
    o_ref[...] = out_t + b2_ref[...]


def _plan_batch_tiles(B, per_row_bytes, resident_bytes, budget_bytes, tile_m_cap):
    """Pick (TM, Bp): balanced, 128-lane aligned tiles (transposed output wants the
    batch on lanes), >= 2 grid steps when possible so v7x megacore gets both cores."""
    if B < 2 * LANES:
        return B, B                       # single full-dim block: no padding at all
    cap = (budget_bytes - resident_bytes) // max(per_row_bytes, 1)
    cap = max(LANES, min(tile_m_cap, cap) // LANES * LANES)
    n_tiles = max(2, pl.cdiv(B, cap))     # >= 2 steps for the 2 TensorCores on v7x
    TM = _round_up(pl.cdiv(B, n_tiles), LANES)
    Bp = TM * pl.cdiv(B, TM)
    return TM, Bp


def neural_net2_forward(x, w1, b1, w2, b2, *, tile_m_cap=1024,
                        vmem_budget_bytes=40 * 1024 * 1024):
    """x: (B, In); w1: (H, In); b1: (H,); w2: (C, H); b2: (C,) -- PyTorch conventions."""
    B, In = x.shape
    H = w1.shape[0]
    C = w2.shape[0]

    # ---- parameter prep (hoisted to param-creation time in production) ----
    w1t = w1.T.astype(jnp.bfloat16)                 # (In, H): canonical MXU RHS
    w2b = w2.astype(jnp.bfloat16)                   # (C, H):  canonical LHS for out_T
    b1r = b1.astype(jnp.float32).reshape(1, H)
    b2c = b2.astype(jnp.float32).reshape(C, 1)

    # ---- generation-aware batch tiling / VMEM budgeting ----
    resident_bytes = 2 * ((In * H + C * H) * 2 + (H + C) * 4)   # double-buffered weights
    per_row_bytes = 2 * (In * 4) + 2 * (C * 4) + H * 6          # x/out tiles + live h
    TM, Bp = _plan_batch_tiles(B, per_row_bytes, resident_bytes,
                               vmem_budget_bytes, tile_m_cap)
    vmem_limit = int(min(max(resident_bytes + 2 * TM * per_row_bytes, 16 << 20),
                         vmem_budget_bytes))

    x_in = x.astype(jnp.float32)                    # no wrapper bf16 cast; kernel casts
    if Bp != B:                                     # only the multi-tile path pads
        x_in = jnp.pad(x_in, ((0, Bp - B), (0, 0)))

    out_t = pl.pallas_call(
        _mlp_kernel,
        out_shape=jax.ShapeDtypeStruct((C, Bp), jnp.float32),
        grid=(Bp // TM,),
        in_specs=[
            pl.BlockSpec((TM, In), lambda i: (i, 0)),   # x tile  f32 (pipelined)
            pl.BlockSpec((In, H), lambda i: (0, 0)),    # W1^T    bf16 (resident)
            pl.BlockSpec((1, H), lambda i: (0, 0)),     # b1 row  f32  (resident)
            pl.BlockSpec((C, H), lambda i: (0, 0)),     # W2      bf16 (resident)
            pl.BlockSpec((C, 1), lambda i: (0, 0)),     # b2 col  f32  (resident)
        ],
        out_specs=pl.BlockSpec((C, TM), lambda i: (0, i)),  # batch on lanes, unpadded C
        compiler_params=pltpu.CompilerParams(
            dimension_semantics=("parallel",),          # megacore sharding on v7x
            vmem_limit_bytes=vmem_limit,
        ),
    )(x_in, w1t, b1r, w2b, b2c)

    # Tiny (C, B) -> (B, C) transpose in the wrapper (replaces the old padded slice).
    return out_t[:, :B].T


def neural_net2_ref(x, w1, b1, w2, b2):
    h = jnp.maximum(x @ w1.T + b1, 0.0)
    return h @ w2.T + b2


if __name__ == "__main__":
    # Small shapes consistent with NeuralNet2(input_size, hidden_size, num_classes).
    B, input_size, hidden_size, num_classes = 8, 32, 64, 16

    key = jax.random.PRNGKey(0)
    kx, kw1, kb1, kw2, kb2 = jax.random.split(key, 5)

    x = jax.random.normal(kx, (B, input_size), dtype=jnp.float32)
    bound1 = 1.0 / (input_size ** 0.5)
    w1 = jax.random.uniform(kw1, (hidden_size, input_size), jnp.float32, -bound1, bound1)
    b1 = jax.random.uniform(kb1, (hidden_size,), jnp.float32, -bound1, bound1)
    bound2 = 1.0 / (hidden_size ** 0.5)
    w2 = jax.random.uniform(kw2, (num_classes, hidden_size), jnp.float32, -bound2, bound2)
    b2 = jax.random.uniform(kb2, (num_classes,), jnp.float32, -bound2, bound2)

    out = neural_net2_forward(x, w1, b1, w2, b2)
    jax.block_until_ready(out)

    ref = neural_net2_ref(x, w1, b1, w2, b2)
    assert out.shape == (B, num_classes)
    # bf16 MXU operands with f32 accumulation -> tolerance sized for bf16 roundoff.
    assert jnp.allclose(out, ref, atol=2e-2, rtol=2e-2), float(jnp.max(jnp.abs(out - ref)))

    print("KERNEL_OK")
</pallas_src>

<mosaic_0001>
module attributes {stable_mosaic.version = 11 : i64} {
  func.func @_mlp_kernel(%arg0: i32, %arg1: memref<8x32xf32, #tpu.memory_space<vmem>>, %arg2: memref<32x64xbf16, #tpu.memory_space<vmem>>, %arg3: memref<1x64xf32, #tpu.memory_space<vmem>>, %arg4: memref<16x64xbf16, #tpu.memory_space<vmem>>, %arg5: memref<16x1xf32, #tpu.memory_space<vmem>>, %arg6: memref<16x8xf32, #tpu.memory_space<vmem>>) attributes {dimension_semantics = [#tpu.dimension_semantics<parallel>], iteration_bounds = array<i64: 1>, scalar_prefetch = 0 : i64, scratch_operands = 0 : i64, tpu.core_type = #tpu.core_type<tc>, window_params = [{transform_indices = @transform_0, window_bounds = array<i64: 8, 32>}, {pipeline_mode = #tpu.pipeline_mode<synchronous>, transform_indices = @transform_1, window_bounds = array<i64: 32, 64>}, {pipeline_mode = #tpu.pipeline_mode<synchronous>, transform_indices = @transform_2, window_bounds = array<i64: 1, 64>}, {pipeline_mode = #tpu.pipeline_mode<synchronous>, transform_indices = @transform_3, window_bounds = array<i64: 16, 64>}, {pipeline_mode = #tpu.pipeline_mode<synchronous>, transform_indices = @transform_4, window_bounds = array<i64: 16, 1>}, {transform_indices = @transform_5, window_bounds = array<i64: 16, 8>}]} {
    %c0 = arith.constant 0 : index
    %c0_0 = arith.constant 0 : index
    %0 = vector.load %arg1[%c0, %c0_0] : memref<8x32xf32, #tpu.memory_space<vmem>>, vector<8x32xf32>
    %1 = arith.truncf %0 : vector<8x32xf32> to vector<8x32xbf16>
    %c0_1 = arith.constant 0 : index
    %c0_2 = arith.constant 0 : index
    %2 = vector.load %arg2[%c0_1, %c0_2] : memref<32x64xbf16, #tpu.memory_space<vmem>>, vector<32x64xbf16>
    %cst = arith.constant dense<0.000000e+00> : vector<8x64xf32>
    %3 = tpu.matmul %1, %2, %cst {dimension_numbers = #tpu.dot_dimension_numbers<[1], [0], [0], [1], [0, 0, 1, 1], [], []>} : vector<8x32xbf16>, vector<32x64xbf16>, vector<8x64xf32> -> vector<8x64xf32>
    %c0_3 = arith.constant 0 : index
    %c0_4 = arith.constant 0 : index
    %4 = vector.load %arg3[%c0_3, %c0_4] : memref<1x64xf32, #tpu.memory_space<vmem>>, vector<1x64xf32>
    %5 = vector.broadcast %4 : vector<1x64xf32> to vector<8x64xf32>
    %6 = arith.addf %3, %5 : vector<8x64xf32>
    %cst_5 = arith.constant 0.000000e+00 : f32
    %7 = vector.broadcast %cst_5 : f32 to vector<8x64xf32>
    %8 = arith.maximumf %6, %7 : vector<8x64xf32>
    %9 = arith.truncf %8 : vector<8x64xf32> to vector<8x64xbf16>
    %c0_6 = arith.constant 0 : index
    %c0_7 = arith.constant 0 : index
    %10 = vector.load %arg4[%c0_6, %c0_7] : memref<16x64xbf16, #tpu.memory_space<vmem>>, vector<16x64xbf16>
    %cst_8 = arith.constant dense<0.000000e+00> : vector<16x8xf32>
    %11 = tpu.matmul %10, %9, %cst_8 {dimension_numbers = #tpu.dot_dimension_numbers<[1], [1], [0], [0], [0, 0, 1, 0], [], []>} : vector<16x64xbf16>, vector<8x64xbf16>, vector<16x8xf32> -> vector<16x8xf32>
    %c0_9 = arith.constant 0 : index
    %c0_10 = arith.constant 0 : index
    %12 = vector.load %arg5[%c0_9, %c0_10] : memref<16x1xf32, #tpu.memory_space<vmem>>, vector<16x1xf32>
    %13 = vector.broadcast %12 : vector<16x1xf32> to vector<16x8xf32>
    %14 = arith.addf %11, %13 : vector<16x8xf32>
    %c0_11 = arith.constant 0 : index
    %c0_12 = arith.constant 0 : index
    %15 = vector.load %arg6[%c0_11, %c0_12] : memref<16x8xf32, #tpu.memory_space<vmem>>, vector<16x8xf32>
    tpu.vector_store %arg6[%c0_11, %c0_12], %14 {strides = array<i32>} : memref<16x8xf32, #tpu.memory_space<vmem>>, vector<16x8xf32>,
    return
  }
  func.func @transform_0(%arg0: i32) -> (i32, i32) {
    %c0_i32 = arith.constant 0 : i32
    %c0_i32_0 = arith.constant 0 : i32
    return %arg0, %c0_i32 : i32, i32
  }
  func.func @transform_1(%arg0: i32) -> (i32, i32) {
    %c0_i32 = arith.constant 0 : i32
    %c0_i32_0 = arith.constant 0 : i32
    %c0_i32_1 = arith.constant 0 : i32
    return %c0_i32, %c0_i32_0 : i32, i32
  }
  func.func @transform_2(%arg0: i32) -> (i32, i32) {
    %c0_i32 = arith.constant 0 : i32
    %c0_i32_0 = arith.constant 0 : i32
    %c0_i32_1 = arith.constant 0 : i32
    return %c0_i32, %c0_i32_0 : i32, i32
  }
  func.func @transform_3(%arg0: i32) -> (i32, i32) {
    %c0_i32 = arith.constant 0 : i32
    %c0_i32_0 = arith.constant 0 : i32
    %c0_i32_1 = arith.constant 0 : i32
    return %c0_i32, %c0_i32_0 : i32, i32
  }
  func.func @transform_4(%arg0: i32) -> (i32, i32) {
    %c0_i32 = arith.constant 0 : i32
    %c0_i32_0 = arith.constant 0 : i32
    %c0_i32_1 = arith.constant 0 : i32
    return %c0_i32, %c0_i32_0 : i32, i32
  }
  func.func @transform_5(%arg0: i32) -> (i32, i32) {
    %c0_i32 = arith.constant 0 : i32
    %c0_i32_0 = arith.constant 0 : i32
    return %c0_i32, %arg0 : i32, i32
  }
}

</mosaic_0001>

<llo_original>
// kernel: tpu_custom_call.1
$region0: #{tpu_custom_call.1}
  #allocation0 [shape = 'u32[]', space=smem, size = 0x4, offset = 0x4, fixed_abs, tag = 'smem constant byte address 0x4 - core index']
  #allocation1 [shape = 'u32[144,128]{1,0:T(1,128)}', space=vmem, size = 0x12000, scoped, tag = 'internal scratch']
  %s0 = inlined_call_operand.hbm [shape: f32[8,32], index: 0, kind: input, shape index: {}]
  %s1 = inlined_call_operand.vmem [shape: bf16[32,64], index: 1, kind: input, shape index: {}]
  %s2 = inlined_call_operand.vmem [shape: f32[1,64], index: 2, kind: input, shape index: {}]
  %s3 = inlined_call_operand.hbm [shape: bf16[16,64], index: 3, kind: input, shape index: {}]
  %s4 = inlined_call_operand.vmem [shape: f32[16,1], index: 4, kind: input, shape index: {}]
  %s5 = inlined_call_operand.vmem [shape: f32[16,8], index: 5, kind: output, shape index: {}]
  %s6 = sld [smem:[#allocation0]]
  $region38: #{tpu_custom_call.1} parent=0
    _
  %s8 = ssub.s32 1, %s6
  %s9 = scalar_select 0, %s8, %s6
  $region1: #{tpu_custom_call.1} parent=0
    #allocation2 [shape = 'u8[4096]{0}', space=vmem, size = 0x1000, scoped, tag = 'input window, operand 0, single buffered']
    #allocation3 [shape = 's32[1]{0}', space=sflag, size = 0x4, scoped, tag = 'scoped memory for tpu_custom_call.1']
    #allocation4 [shape = 'u8[4096]{0}', space=vmem, size = 0x1000, scoped, tag = 'input window, operand 3, single buffered']
    #allocation5 [shape = 's32[1]{0}', space=sflag, size = 0x4, scoped, tag = 'scoped memory for tpu_custom_call.1']
    %10 = vsyncpa [#allocation3], 0
    %11 = vsyncpa [#allocation5], 0
    // Predicated region
    $region2: #{tpu_custom_call.1} parent=1 // pred_check
      _
    $region3: #{tpu_custom_call.1} parent=1 // pred_check_branch
      %13 = sbr.rel (0) target = $region5
    $region4: #{tpu_custom_call.1} parent=1 // pred_region
      %s15 = ssub.s32 128, 128
      %16 = vsyncadd [#allocation3], %s15
      %s18 = sshll.u32 [#allocation2], 4
      %s19 = int_to_ptr.vmem [resolvable:$true] %s18
      %21 = dma.hbm_to_vmem [thread:$0]  %s0, 128, %s19, [#allocation3]
    $region5: #{tpu_custom_call.1} parent=1 // pred_fallthru
      _
    // Predicated region
    $region6: #{tpu_custom_call.1} parent=1 // pred_check
      _
    $region7: #{tpu_custom_call.1} parent=1 // pred_check_branch
      %23 = sbr.rel (0) target = $region9
    $region8: #{tpu_custom_call.1} parent=1 // pred_region
      _
    $region9: #{tpu_custom_call.1} parent=1 // pred_fallthru
      _
    // Predicated region
    $region10: #{tpu_custom_call.1} parent=1 // pred_check
      _
    $region11: #{tpu_custom_call.1} parent=1 // pred_check_branch
      %25 = sbr.rel (0) target = $region13
    $region12: #{tpu_custom_call.1} parent=1 // pred_region
      _
    $region13: #{tpu_custom_call.1} parent=1 // pred_fallthru
      _
    // Predicated region
    $region14: #{tpu_custom_call.1} parent=1 // pred_check
      _
    $region15: #{tpu_custom_call.1} parent=1 // pred_check_branch
      %27 = sbr.rel (0) target = $region17
    $region16: #{tpu_custom_call.1} parent=1 // pred_region
      %s29 = ssub.s32 128, 128
      %30 = vsyncadd [#allocation5], %s29
      %s31 = sshll.u32 [#allocation4], 4
      %s32 = int_to_ptr.vmem [resolvable:$true] %s31
      %37 = dma.hbm_to_vmem [thread:$0]  %s3, 128, %s32, [#allocation5], 64, 64, 4
    $region17: #{tpu_custom_call.1} parent=1 // pred_fallthru
      _
    // Predicated region
    $region18: #{tpu_custom_call.1} parent=1 // pred_check
      _
    $region19: #{tpu_custom_call.1} parent=1 // pred_check_branch
      %39 = sbr.rel (0) target = $region21
    $region20: #{tpu_custom_call.1} parent=1 // pred_region
      _
    $region21: #{tpu_custom_call.1} parent=1 // pred_fallthru
      _
    // Predicated region
    $region22: #{tpu_custom_call.1} parent=1 // pred_check
      _
    $region23: #{tpu_custom_call.1} parent=1 // pred_check_branch
      %41 = sbr.rel (0) target = $region25
    $region24: #{tpu_custom_call.1} parent=1 // pred_region
      %42 = dma.done [#allocation3], 128
    $region25: #{tpu_custom_call.1} parent=1 // pred_fallthru
      _
    // Predicated region
    $region26: #{tpu_custom_call.1} parent=1 // pred_check
      _
    $region27: #{tpu_custom_call.1} parent=1 // pred_check_branch
      %44 = sbr.rel (0) target = $region29
    $region28: #{tpu_custom_call.1} parent=1 // pred_region
      %45 = dma.done [#allocation5], 128
    $region29: #{tpu_custom_call.1} parent=1 // pred_fallthru
      _
    %v47 = vld [vmem:[#allocation2] sm:$0xff]
    %v48 = vpack.c.bf16 %v47, %v47
    %v49 = vld [vmem:[%s1] sm:$0xf]
    %v50 = vld [vmem:[%s1 + $0x4] sm:$0xf]
    %v51 = vld [vmem:[%s1 + $0x8] sm:$0xf]
    %v52 = vld [vmem:[%s1 + $0xc] sm:$0xf]
    %v53 = vld [vmem:[%s2] sm:$0x1]
    %v55 = vlaneseq
    %v56 = vshrl.u32 %v55, 7
    %v57 = vsub.s32 0, %v56
    %v58 = vrot.slane %v53, %v57
    %v64 = vunpack.c.l.b16 %v49
    %v65 = vunpack.c.l.b16 %v50
    %v66 = vunpack.c.l.b16 %v51
    %v67 = vunpack.c.l.b16 %v52
    %v68 = vpack.c.b16 %v65, %v64
    %v69 = vpack.c.b16 %v67, %v66
    %vm72 = vcmask 261120
    %v74 = vsel %vm72, %v48, 0
    %76 = vmatprep.subr.bf16.mxu0 0
    %77 = vmatpush1.bf16.msra.mxu0 0
    %78 = vmatprep.subr.bf16.mxu0 0
    %79 = vmatpush1.bf16.msra.mxu0 0
    %80 = vmatprep.subr.bf16.mxu0 0
    %81 = vmatpush1.bf16.msra.mxu0 0
    %82 = vmatprep.subr.bf16.mxu0 0
    %83 = vmatpush1.bf16.msra.mxu0 0
    %84 = vmatprep.subr.bf16.mxu0 0
    %85 = vmatpush1.bf16.msra.mxu0 0
    %86 = vmatprep.subr.bf16.mxu0 0
    %87 = vmatpush1.bf16.msra.mxu0 0
    %88 = vmatprep.subr.bf16.mxu0 0
    %89 = vmatpush1.bf16.msra.mxu0 %v69
    %90 = vmatprep.subr.bf16.mxu0 0
    %91 = vmatpush1.bf16.msra.mxu0 %v68
    %92 = vmatprep.subr.bf16.mxu0 0
    %93 = vmatpush2.bf16.msra.mxu0 0
    %94 = vmatprep.subr.bf16.mxu0 0
    %95 = vmatpush2.bf16.msra.mxu0 0
    %96 = vmatprep.subr.bf16.mxu0 0
    %97 = vmatpush2.bf16.msra.mxu0 0
    %98 = vmatprep.subr.bf16.mxu0 0
    %99 = vmatpush2.bf16.msra.mxu0 0
    %100 = vmatprep.subr.bf16.mxu0 0
    %101 = vmatpush2.bf16.msra.mxu0 0
    %102 = vmatprep.subr.bf16.mxu0 0
    %103 = vmatpush2.bf16.msra.mxu0 0
    %104 = vmatprep.subr.bf16.mxu0 0
    %105 = vmatpush2.bf16.msra.mxu0 0
    %106 = vmatprep.subr.bf16.mxu0 0
    %107 = vmatpush2.bf16.msra.mxu0 0
    %108 = vmatprep.mubr.bf16.mxu0 0
    %109 = vmatmul.mubr.bf16.gmra.mxu0 %v74
    %v110 = vpop.f32.mrf.mxu0
    %v111 = vadd.f32 %v58, %v110
    %v112 = vpop.f32.mrf.mxu0
    %v113 = vpop.f32.mrf.mxu0
    %v114 = vpop.f32.mrf.mxu0
    %115 = vdwg.mxu0
    %v116 = vmax.f32 %v111, 0.0
    %v117 = vpack.c.bf16 %v116, %v116
    %v118 = vld [vmem:[#allocation4] sm:$0xf]
    %v119 = vld [vmem:[#allocation4 + $0x4] sm:$0xf]
    %v120 = vld [vmem:[%s4] sm:$0xff]
    %v121 = vld [vmem:[%s4 + $0x8] sm:$0xff]
    %123 = vset.pattern.permute.xlu0 0
    %124 = vperm.xlu0 %123, %v120
    %v125 = vpop.permute.xlu0 %124
    %128 = vset.pattern.permute.xlu0 0
    %129 = vperm.xlu0 %128, %v121
    %v130 = vpop.permute.xlu0 %129
    %v134 = vunpack.c.l.b16 %v118
    %v135 = vunpack.c.l.b16 %v119
    %v136 = vpack.c.b16 %v135, %v134
    %vm137 = vcmask 523264
    %v139 = vsel %vm137, %v136, 0
    %v142 = vsel %vm137, %v117, 0
    %144 = vmatprep.subr.bf16.mxu0 0
    %145 = vmatpush1.bf16.xpose.msra.mxu0 0
    %146 = vmatprep.subr.bf16.mxu0 0
    %147 = vmatpush1.bf16.xpose.msra.mxu0 0
    %148 = vmatprep.subr.bf16.mxu0 0
    %149 = vmatpush1.bf16.xpose.msra.mxu0 0
    %150 = vmatprep.subr.bf16.mxu0 0
    %151 = vmatpush1.bf16.xpose.msra.mxu0 0
    %152 = vmatprep.subr.bf16.mxu0 0
    %153 = vmatpush1.bf16.xpose.msra.mxu0 0
    %154 = vmatprep.subr.bf16.mxu0 0
    %155 = vmatpush1.bf16.xpose.msra.mxu0 0
    %156 = vmatprep.subr.bf16.mxu0 0
    %157 = vmatpush1.bf16.xpose.msra.mxu0 0
    %158 = vmatprep.subr.bf16.mxu0 0
    %159 = vmatpush1.bf16.xpose.msra.mxu0 %v142
    %160 = vmatprep.subr.bf16.mxu0 0
    %161 = vmatpush2.bf16.xpose.msra.mxu0 0
    %162 = vmatprep.subr.bf16.mxu0 0
    %163 = vmatpush2.bf16.xpose.msra.mxu0 0
    %164 = vmatprep.subr.bf16.mxu0 0
    %165 = vmatpush2.bf16.xpose.msra.mxu0 0
    %166 = vmatprep.subr.bf16.mxu0 0
    %167 = vmatpush2.bf16.xpose.msra.mxu0 0
    %168 = vmatprep.subr.bf16.mxu0 0
    %169 = vmatpush2.bf16.xpose.msra.mxu0 0
    %170 = vmatprep.subr.bf16.mxu0 0
    %171 = vmatpush2.bf16.xpose.msra.mxu0 0
    %172 = vmatprep.subr.bf16.mxu0 0
    %173 = vmatpush2.bf16.xpose.msra.mxu0 0
    %174 = vmatprep.subr.bf16.mxu0 0
    %175 = vmatpush2.bf16.xpose.msra.mxu0 0
    %176 = vmatprep.mubr.bf16.mxu0 0
    %177 = vmatmul.mubr.bf16.gmra.mxu0 %v139
    %v178 = vpop.f32.mrf.mxu0
    %v179 = vadd.f32 %v125, %v178
    %v180 = vpop.f32.mrf.mxu0
    %v181 = vpop.f32.mrf.mxu0
    %v182 = vadd.f32 %v130, %v181
    %v183 = vpop.f32.mrf.mxu0
    %184 = vdwg.mxu0
    %vm185 = vcmask 64512
    %186 = vst.msk [vmem:[%s5] sm:$0xff] %vm185, %v179
    %187 = vst.msk [vmem:[%s5 + $0x8] sm:$0xff] %vm185, %v182
    // Predicated region
    $region30: #{tpu_custom_call.1} parent=1 // pred_check
      _
    $region31: #{tpu_custom_call.1} parent=1 // pred_check_branch
      %189 = sbr.rel (0) target = $region33
    $region32: #{tpu_custom_call.1} parent=1 // pred_region
      _
    $region33: #{tpu_custom_call.1} parent=1 // pred_fallthru
      _
    // Predicated region
    $region34: #{tpu_custom_call.1} parent=1 // pred_check
      _
    $region35: #{tpu_custom_call.1} parent=1 // pred_check_branch
      %191 = sbr.rel (0) target = $region37
    $region36: #{tpu_custom_call.1} parent=1 // pred_region
      _
    $region37: #{tpu_custom_call.1} parent=1 // pred_fallthru
      _
    %192 = vsyncpa [#allocation3], 1
    %193 = vsyncpa [#allocation5], 1

</llo_original>
